<compile_context>
chip_gen: v7x
topology: tpu7x:2x2x1
jax: 0.10.0
libtpu: 0.0.40
codegen_flags: <defaults>
</compile_context>

<pallas_src>
import functools

import jax
import jax.numpy as jnp
import numpy as np
from jax.experimental import pallas as pl
from jax.experimental.pallas import tpu as pltpu


def _round_up(x, m):
    return ((x + m - 1) // m) * m


def _nbytes(shape, dtype):
    return int(np.prod(shape)) * jnp.dtype(dtype).itemsize


# ----------------------------------------------------------------------------
# Kernel 1: k projection (1x1 conv as one wide matmul), once per batch element.
# ----------------------------------------------------------------------------
def _k_proj_kernel(k_ref, wk_ref, bk_ref, kpT_ref):
    # k_ref  : [1, D, HWp]   (NCHW reshape, HW lane-dense, spatial zero-padded)
    # wk_ref : [hid, D], bk_ref: [hid, 1] (f32)
    # kpT_ref: [1, hid, HWp] in score dtype
    kp = (jnp.dot(wk_ref[...], k_ref[0], preferred_element_type=jnp.float32)
          + bk_ref[...])
    kpT_ref[0] = kp.astype(kpT_ref.dtype)


# ----------------------------------------------------------------------------
# Kernel 2: per-head scores + masking + flattened softmax, written in place
# into the lane-dense output slab (no logits scratch).
# ----------------------------------------------------------------------------
def _mha_map_kernel(q_ref, kpT_ref, mask_ref, wq_ref, bq_ref, out_ref, *,
                    num_heads, head_dim, hw):
    # q_ref   : [1, Qb, D]          (norm_fact folded into wq/bq)
    # kpT_ref : [1, hid, HWp]       (precomputed k projection)
    # mask_ref: [1, 1, HWp] int32   (nonzero => -inf; includes lane padding)
    # wq_ref  : [N, D, cd] (score dtype), bq_ref: [N, 1, cd] (f32)
    # out_ref : [1, Qb, N*HWp]
    q = q_ref[0]                      # [Qb, D]
    masked = mask_ref[0] != 0         # [1, HWp] -> broadcasts over queries
    score_dtype = q_ref.dtype         # bf16 if compute_dtype=bf16, else f32

    row_max = None                    # running [Qb, 1] max across heads
    for n in range(num_heads):
        # tiny per-head q projection (f32 accumulate, norm_fact pre-folded)
        qp = (jnp.dot(q, wq_ref[n], preferred_element_type=jnp.float32)
              + bq_ref[n]).astype(score_dtype)                       # [Qb, cd]
        kp_n = kpT_ref[0, n * head_dim:(n + 1) * head_dim, :]        # [cd, HWp]
        s = jnp.dot(qp, kp_n, preferred_element_type=jnp.float32)    # [Qb, HWp]
        s = jnp.where(masked, -jnp.inf, s)                           # masked_fill
        m_n = jnp.max(s, axis=-1, keepdims=True)
        row_max = m_n if row_max is None else jnp.maximum(row_max, m_n)
        # lane-aligned static-offset store straight into the output slab
        out_ref[0, :, n * hw:(n + 1) * hw] = s.astype(out_ref.dtype)

    # numerically-stable softmax over the flattened (heads, H, W) axis,
    # in place on the output slab (exp + sum + exact divide only)
    w = out_ref[0].astype(jnp.float32)                               # [Qb, N*HWp]
    e = jnp.exp(w - row_max)
    denom = jnp.sum(e, axis=-1, keepdims=True)
    out_ref[0] = (e / denom).astype(out_ref.dtype)
    # dropout p=0.0 -> identity (eval)


# ----------------------------------------------------------------------------
# Wrapper
# ----------------------------------------------------------------------------
def mh_attention_map(q, k_nchw, wq, bq, wk, bk, *, num_heads, mask=None,
                     q_block=None, compute_dtype=None, out_dtype=jnp.float32,
                     vmem_limit_bytes=None):
    """Pallas implementation of MHAttentionMap.forward -> [B, Q, N, H, W]."""
    B, Qn, D = q.shape
    _, Dk, H, W = k_nchw.shape
    assert Dk == D
    hid = wq.shape[0]
    cd = hid // num_heads
    HW = H * W
    norm_fact = float(hid / num_heads) ** (-0.5)
    score_dtype = compute_dtype if compute_dtype is not None else jnp.float32

    # ---- lane padding of the spatial axis (per-head span multiple of 128) ----
    HWp = _round_up(HW, 128)

    # ---- bounded Q tiling (pad Q instead of falling back to q_block = Qn) ----
    if q_block is None:
        q_block = min(128, _round_up(max(Qn, 1), 8))
    q_block = _round_up(q_block, 8)
    Qp = _round_up(Qn, q_block)
    n_qblk = Qp // q_block

    # ---- layout prep (trace-time reshapes / tiny weight transforms) ----------
    k_dhw = k_nchw.reshape(B, D, HW)                         # pure reshape, no transpose
    if HWp != HW:
        k_dhw = jnp.pad(k_dhw, ((0, 0), (0, 0), (0, HWp - HW)))
    if Qp != Qn:
        q = jnp.pad(q, ((0, 0), (0, Qp - Qn), (0, 0)))

    wq_h = jnp.transpose(wq.reshape(num_heads, cd, D), (0, 2, 1)) * norm_fact
    bq_h = (bq.reshape(num_heads, 1, cd) * norm_fact).astype(jnp.float32)
    bk_col = bk.reshape(hid, 1).astype(jnp.float32)

    if mask is None:
        mask_core = jnp.zeros((B, 1, HW), jnp.int32)
    else:
        mask_core = mask.reshape(B, 1, HW).astype(jnp.int32)
    if HWp != HW:   # padded lanes are always masked -> exp() = 0
        mask_arr = jnp.concatenate(
            [mask_core, jnp.ones((B, 1, HWp - HW), jnp.int32)], axis=-1)
    else:
        mask_arr = mask_core

    q_c = q.astype(score_dtype)
    k_c = k_dhw.astype(score_dtype)
    wq_c = wq_h.astype(score_dtype)
    wk_c = wk.astype(score_dtype)                            # [hid, D]
    # biases stay f32 (added to the f32 accumulators)

    # ---- kernel 1: k projection, once per batch element ---------------------
    kpT = pl.pallas_call(
        _k_proj_kernel,
        out_shape=jax.ShapeDtypeStruct((B, hid, HWp), score_dtype),
        grid_spec=pltpu.PrefetchScalarGridSpec(
            num_scalar_prefetch=0,
            grid=(B,),
            in_specs=[
                pl.BlockSpec((1, D, HWp), lambda b: (b, 0, 0)),
                pl.BlockSpec((hid, D), lambda b: (0, 0)),
                pl.BlockSpec((hid, 1), lambda b: (0, 0)),
            ],
            out_specs=pl.BlockSpec((1, hid, HWp), lambda b: (b, 0, 0)),
        ),
        compiler_params=pltpu.CompilerParams(
            dimension_semantics=("parallel",)),
    )(k_c, wk_c, bk_col)

    # ---- VMEM budget for the main kernel (explicit, generation-portable) ----
    if vmem_limit_bytes is None:
        budget = (
            2 * _nbytes((q_block, D), score_dtype)                     # q tile (dbl buf)
            + 2 * _nbytes((hid, HWp), score_dtype)                     # kpT tile
            + 2 * _nbytes((1, HWp), jnp.int32)                         # mask tile
            + 2 * _nbytes((q_block, num_heads * HWp), out_dtype)       # out tile (dbl buf)
            + _nbytes((num_heads, D, cd), score_dtype)                 # wq
            + _nbytes((num_heads, 1, cd), jnp.float32)                 # bq
            + 3 * _nbytes((q_block, num_heads * HWp), jnp.float32)     # f32 softmax temps
        )
        vmem_limit_bytes = int(min(64 * 1024 * 1024,
                                   max(32 * 1024 * 1024, 2 * budget)))

    kern = functools.partial(_mha_map_kernel, num_heads=num_heads,
                             head_dim=cd, hw=HWp)

    # ---- kernel 2: scores + mask + flattened softmax -------------------------
    out = pl.pallas_call(
        kern,
        out_shape=jax.ShapeDtypeStruct((B, Qp, num_heads * HWp), out_dtype),
        grid_spec=pltpu.PrefetchScalarGridSpec(
            num_scalar_prefetch=0,
            grid=(B, n_qblk),
            in_specs=[
                pl.BlockSpec((1, q_block, D), lambda b, qi: (b, qi, 0)),
                pl.BlockSpec((1, hid, HWp), lambda b, qi: (b, 0, 0)),
                pl.BlockSpec((1, 1, HWp), lambda b, qi: (b, 0, 0)),
                pl.BlockSpec((num_heads, D, cd), lambda b, qi: (0, 0, 0)),
                pl.BlockSpec((num_heads, 1, cd), lambda b, qi: (0, 0, 0)),
            ],
            out_specs=pl.BlockSpec((1, q_block, num_heads * HWp),
                                   lambda b, qi: (b, qi, 0)),
        ),
        compiler_params=pltpu.CompilerParams(
            dimension_semantics=("parallel", "parallel"),
            vmem_limit_bytes=vmem_limit_bytes),
    )(q_c, kpT, mask_arr, wq_c, bq_h)

    # strip Q padding and per-head lane padding, restore [B, Q, N, H, W]
    out = out.reshape(B, Qp, num_heads, HWp)[:, :Qn, :, :HW]
    return out.reshape(B, Qn, num_heads, H, W)


# ----------------------------------------------------------------------------
# Pure-JAX reference reproducing the PyTorch forward exactly.
# ----------------------------------------------------------------------------
def _reference(q, k, wq, bq, wk, bk, num_heads, mask=None):
    B, Qn, D = q.shape
    hid = wq.shape[0]
    cd = hid // num_heads
    _, _, H, W = k.shape
    norm = float(hid / num_heads) ** (-0.5)
    qp = q @ wq.T + bq                                                  # [B, Q, hid]
    kp = jnp.einsum('bchw,oc->bohw', k, wk) + bk[None, :, None, None]   # 1x1 conv
    qh = qp.reshape(B, Qn, num_heads, cd)
    kh = kp.reshape(B, num_heads, cd, H, W)
    weights = jnp.einsum('bqnc,bnchw->bqnhw', qh * norm, kh)
    if mask is not None:
        weights = jnp.where(mask[:, None, None, :, :], -jnp.inf, weights)
    flat = weights.reshape(B, Qn, -1)
    return jax.nn.softmax(flat, axis=-1).reshape(weights.shape)


if __name__ == "__main__":
    # ---- main config (spatial lane-aligned, Q a multiple of 8) ----
    B, Qn, QUERY_DIM, HIDDEN_DIM, NUM_HEADS, H, W = 2, 8, 32, 32, 4, 16, 16

    key = jax.random.PRNGKey(0)
    kq, kk, kwq, kwk, kbq, kbk, km = jax.random.split(key, 7)

    q = jax.random.normal(kq, (B, Qn, QUERY_DIM), jnp.float32)
    k = jax.random.normal(kk, (B, QUERY_DIM, H, W), jnp.float32)     # NCHW like PyTorch

    limit = float(np.sqrt(6.0 / (QUERY_DIM + HIDDEN_DIM)))
    wq = jax.random.uniform(kwq, (HIDDEN_DIM, QUERY_DIM), jnp.float32, -limit, limit)
    wk = jax.random.uniform(kwk, (HIDDEN_DIM, QUERY_DIM), jnp.float32, -limit, limit)
    bq = 0.1 * jax.random.normal(kbq, (HIDDEN_DIM,), jnp.float32)
    bk = 0.1 * jax.random.normal(kbk, (HIDDEN_DIM,), jnp.float32)
    mask = jax.random.bernoulli(km, 0.15, (B, H, W))                 # True => masked

    # 1) f32, no mask
    out = jax.block_until_ready(
        mh_attention_map(q, k, wq, bq, wk, bk, num_heads=NUM_HEADS))
    ref = _reference(q, k, wq, bq, wk, bk, NUM_HEADS)
    assert out.shape == (B, Qn, NUM_HEADS, H, W)
    np.testing.assert_allclose(np.asarray(out), np.asarray(ref),
                               atol=1e-4, rtol=1e-4)

    # 2) f32, with mask
    out_m = jax.block_until_ready(
        mh_attention_map(q, k, wq, bq, wk, bk, num_heads=NUM_HEADS, mask=mask))
    ref_m = _reference(q, k, wq, bq, wk, bk, NUM_HEADS, mask=mask)
    np.testing.assert_allclose(np.asarray(out_m), np.asarray(ref_m),
                               atol=1e-4, rtol=1e-4)

    # 3) bf16 matmul inputs (bf16-native MXU on v5e/v6e/v7x), f32 accum/output
    out_bf16 = jax.block_until_ready(
        mh_attention_map(q, k, wq, bq, wk, bk, num_heads=NUM_HEADS, mask=mask,
                         compute_dtype=jnp.bfloat16))
    np.testing.assert_allclose(np.asarray(out_bf16), np.asarray(ref_m),
                               atol=2e-2, rtol=2e-2)

    # 4) non-lane-aligned spatial size and non-multiple-of-8 query count
    #    (exercises HW lane padding + Q padding paths), f32
    B2, Q2, H2, W2 = 1, 5, 9, 13
    kq2, kk2, km2 = jax.random.split(jax.random.PRNGKey(1), 3)
    q2 = jax.random.normal(kq2, (B2, Q2, QUERY_DIM), jnp.float32)
    k2 = jax.random.normal(kk2, (B2, QUERY_DIM, H2, W2), jnp.float32)
    mask2 = jax.random.bernoulli(km2, 0.2, (B2, H2, W2))
    out2 = jax.block_until_ready(
        mh_attention_map(q2, k2, wq, bq, wk, bk, num_heads=NUM_HEADS, mask=mask2))
    ref2 = _reference(q2, k2, wq, bq, wk, bk, NUM_HEADS, mask=mask2)
    assert out2.shape == (B2, Q2, NUM_HEADS, H2, W2)
    np.testing.assert_allclose(np.asarray(out2), np.asarray(ref2),
                               atol=1e-4, rtol=1e-4)

    print("KERNEL_OK")
</pallas_src>

<mosaic_0001>
module attributes {stable_mosaic.version = 11 : i64} {
  func.func @_k_proj_kernel(%arg0: i32, %arg1: memref<1x32x256xf32, #tpu.memory_space<vmem>>, %arg2: memref<32x32xf32, #tpu.memory_space<vmem>>, %arg3: memref<32x1xf32, #tpu.memory_space<vmem>>, %arg4: memref<1x32x256xf32, #tpu.memory_space<vmem>>) attributes {dimension_semantics = [#tpu.dimension_semantics<parallel>], iteration_bounds = array<i64: 2>, scalar_prefetch = 0 : i64, scratch_operands = 0 : i64, tpu.core_type = #tpu.core_type<tc>, window_params = [{transform_indices = @transform_0, window_bounds = array<i64: 1, 32, 256>}, {pipeline_mode = #tpu.pipeline_mode<synchronous>, transform_indices = @transform_1, window_bounds = array<i64: 32, 32>}, {pipeline_mode = #tpu.pipeline_mode<synchronous>, transform_indices = @transform_2, window_bounds = array<i64: 32, 1>}, {transform_indices = @transform_3, window_bounds = array<i64: 1, 32, 256>}]} {
    %c0 = arith.constant 0 : index
    %c0_0 = arith.constant 0 : index
    %0 = vector.load %arg2[%c0, %c0_0] : memref<32x32xf32, #tpu.memory_space<vmem>>, vector<32x32xf32>
    %c0_1 = arith.constant 0 : index
    %c0_2 = arith.constant 0 : index
    %c0_3 = arith.constant 0 : index
    %1 = vector.load %arg1[%c0_1, %c0_2, %c0_3] : memref<1x32x256xf32, #tpu.memory_space<vmem>>, vector<1x32x256xf32>
    %2 = vector.shape_cast %1 : vector<1x32x256xf32> to vector<32x256xf32>
    %cst = arith.constant dense<0.000000e+00> : vector<32x256xf32>
    %3 = tpu.matmul %0, %2, %cst {dimension_numbers = #tpu.dot_dimension_numbers<[1], [0], [0], [1], [0, 0, 1, 1], [], []>} : vector<32x32xf32>, vector<32x256xf32>, vector<32x256xf32> -> vector<32x256xf32>
    %c0_4 = arith.constant 0 : index
    %c0_5 = arith.constant 0 : index
    %4 = vector.load %arg3[%c0_4, %c0_5] : memref<32x1xf32, #tpu.memory_space<vmem>>, vector<32x1xf32>
    %5 = vector.broadcast %4 : vector<32x1xf32> to vector<32x256xf32>
    %6 = arith.addf %3, %5 : vector<32x256xf32>
    %c0_6 = arith.constant 0 : index
    %c0_7 = arith.constant 0 : index
    %c0_8 = arith.constant 0 : index
    %7 = vector.load %arg4[%c0_6, %c0_7, %c0_8] : memref<1x32x256xf32, #tpu.memory_space<vmem>>, vector<1x32x256xf32>
    %8 = vector.shape_cast %7 : vector<1x32x256xf32> to vector<32x256xf32>
    %9 = vector.shape_cast %6 : vector<32x256xf32> to vector<1x32x256xf32>
    tpu.vector_store %arg4[%c0_6, %c0_7, %c0_8], %9 {strides = array<i32>} : memref<1x32x256xf32, #tpu.memory_space<vmem>>, vector<1x32x256xf32>,
    return
  }
  func.func @transform_0(%arg0: i32) -> (i32, i32, i32) {
    %c0_i32 = arith.constant 0 : i32
    %c0_i32_0 = arith.constant 0 : i32
    %c0_i32_1 = arith.constant 0 : i32
    return %arg0, %c0_i32, %c0_i32_0 : i32, i32, i32
  }
  func.func @transform_1(%arg0: i32) -> (i32, i32) {
    %c0_i32 = arith.constant 0 : i32
    %c0_i32_0 = arith.constant 0 : i32
    %c0_i32_1 = arith.constant 0 : i32
    return %c0_i32, %c0_i32_0 : i32, i32
  }
  func.func @transform_2(%arg0: i32) -> (i32, i32) {
    %c0_i32 = arith.constant 0 : i32
    %c0_i32_0 = arith.constant 0 : i32
    %c0_i32_1 = arith.constant 0 : i32
    return %c0_i32, %c0_i32_0 : i32, i32
  }
  func.func @transform_3(%arg0: i32) -> (i32, i32, i32) {
    %c0_i32 = arith.constant 0 : i32
    %c0_i32_0 = arith.constant 0 : i32
    %c0_i32_1 = arith.constant 0 : i32
    return %arg0, %c0_i32, %c0_i32_0 : i32, i32, i32
  }
}

</mosaic_0001>

<llo_original>
// kernel: tpu_custom_call.1
$region0: #{tpu_custom_call.1}
  #allocation0 [shape = 'u32[]', space=smem, size = 0x4, offset = 0x4, fixed_abs, tag = 'smem constant byte address 0x4 - core index']
  #allocation1 [shape = 'u32[144,128]{1,0:T(1,128)}', space=vmem, size = 0x12000, scoped, tag = 'internal scratch']
  %s0 = inlined_call_operand.hbm [shape: f32[2,32,256], index: 0, kind: input, shape index: {}]
  %s1 = inlined_call_operand.vmem [shape: f32[32,32], index: 1, kind: input, shape index: {}]
  %s2 = inlined_call_operand.vmem [shape: f32[32,1], index: 2, kind: input, shape index: {}]
  %s3 = inlined_call_operand.hbm [shape: f32[2,32,256], index: 3, kind: output, shape index: {}]
  %s4 = sld [smem:[#allocation0]]
  $region49: #{tpu_custom_call.1} parent=0
    _
  %s6 = ssub.s32 1, %s4
  %s7 = scalar_select 0, %s6, %s4
  $region1: #{tpu_custom_call.1} parent=0
    #allocation2 [shape = 'u8[65536]{0}', space=vmem, size = 0x10000, scoped, tag = 'input window, operand 0']
    #allocation3 [shape = 's32[2]{0}', space=sflag, size = 0x8, scoped, tag = 'scoped memory for tpu_custom_call.1']
    #allocation4 [shape = 's32[2]{0}', space=sflag, size = 0x8, scoped, tag = 'scoped memory for tpu_custom_call.1']
    #allocation5 [shape = 'u8[65536]{0}', space=vmem, size = 0x10000, scoped, tag = 'output window, operand 0']
    %8 = vsyncpa [#allocation3], 0
    %s9 = scalar_lea.sflag [#allocation3], 1
    %10 = vsyncpa %s9, 0
    %11 = vsyncpa [#allocation4], 0
    %s12 = scalar_lea.sflag [#allocation4], 1
    %13 = vsyncpa %s12, 0
    loop: start=0, step=1, limit=4
    $region2: #{tpu_custom_call.1} parent=1 // loop_pre_header
      _
    $region3: #{tpu_custom_call.1} parent=1 // loop_header
      %s15 = sphi 0, %s19
      %p16 = scmp.ge.s32.totalorder %s15, 4
      %s25 = sphi 0, %s27
      %s28 = sphi 0, %s25
      %s29 = sphi 0, %s28
      %s45 = sphi 0, %s29
      %s49 = sphi 0, %s49
      %s51 = sphi 0, %s49
      %s52 = sphi 0, %s51
      %s66 = sphi 0, %s52
      %s70 = sphi 0, %s70
      %s72 = sphi 0, %s70
      %s73 = sphi 0, %s72
      %s87 = sphi 0, %s73
      %s93 = sphi 0, %s95
      %s96 = sphi 0, %s93
      %s97 = sphi 0, %s96
      %s113 = sphi 0, %s97
    $region4: #{tpu_custom_call.1} parent=1 // loop_header_branch
      %18 = sbr.rel (%p16) target = $region8
    $region5: #{tpu_custom_call.1} parent=1 // loop_body
      %s20 = ssub.s32 %s15, 1
      %s21 = ssub.s32 %s15, 2
      %s22 = sadd.s32 %s15, 1
      %s23 = ssub.s32 %s15, %s22
      %p24 = scmp.eq.s32.totalorder %s23, 0
      %s26 = sadd.s32 %s25, 1
      %s27 = scalar_select %p24, %s25, %s26
      %p30 = pneg %p24
      %p31 = scmp.eq.s32.totalorder %s15, 1
      %p32 = por %p30, %p31
      %p33 = scmp.ne.s32.totalorder %s25, %s28
      %p34 = scmp.eq.s32.totalorder %s15, 0
      %p35 = por %p33, %p34
      %p36 = scmp.ne.s32.totalorder %s25, %s28
      %p37 = scmp.eq.s32.totalorder %s20, 1
      %p38 = por %p36, %p37
      %p39 = scmp.ne.s32.totalorder %s28, %s29
      %p40 = scmp.eq.s32.totalorder %s20, 0
      %p41 = por %p39, %p40
      %p42 = scmp.ne.s32.totalorder %s28, %s29
      %p43 = scmp.eq.s32.totalorder %s21, 1
      %p44 = por %p42, %p43
      %p46 = scmp.ne.s32.totalorder %s29, %s45
      %p47 = scmp.eq.s32.totalorder %s21, 0
      %p48 = por %p46, %p47
      %s50 = sadd.s32 %s49, 1
      %p53 = scmp.eq.s32.totalorder %s15, 1
      %p54 = scmp.ne.s32.totalorder %s49, %s51
      %p55 = scmp.eq.s32.totalorder %s15, 0
      %p56 = por %p54, %p55
      %p57 = scmp.ne.s32.totalorder %s49, %s51
      %p58 = scmp.eq.s32.totalorder %s20, 1
      %p59 = por %p57, %p58
      %p60 = scmp.ne.s32.totalorder %s51, %s52
      %p61 = scmp.eq.s32.totalorder %s20, 0
      %p62 = por %p60, %p61
      %p63 = scmp.ne.s32.totalorder %s51, %s52
      %p64 = scmp.eq.s32.totalorder %s21, 1
      %p65 = por %p63, %p64
      %p67 = scmp.ne.s32.totalorder %s52, %s66
      %p68 = scmp.eq.s32.totalorder %s21, 0
      %p69 = por %p67, %p68
      %s71 = sadd.s32 %s70, 1
      %p74 = scmp.eq.s32.totalorder %s15, 1
      %p75 = scmp.ne.s32.totalorder %s70, %s72
      %p76 = scmp.eq.s32.totalorder %s15, 0
      %p77 = por %p75, %p76
      %p78 = scmp.ne.s32.totalorder %s70, %s72
      %p79 = scmp.eq.s32.totalorder %s20, 1
      %p80 = por %p78, %p79
      %p81 = scmp.ne.s32.totalorder %s72, %s73
      %p82 = scmp.eq.s32.totalorder %s20, 0
      %p83 = por %p81, %p82
      %p84 = scmp.ne.s32.totalorder %s72, %s73
      %p85 = scmp.eq.s32.totalorder %s21, 1
      %p86 = por %p84, %p85
      %p88 = scmp.ne.s32.totalorder %s73, %s87
      %p89 = scmp.eq.s32.totalorder %s21, 0
      %p90 = por %p88, %p89
      %s91 = ssub.s32 %s15, %s22
      %p92 = scmp.eq.s32.totalorder %s91, 0
      %s94 = sadd.s32 %s93, 1
      %s95 = scalar_select %p92, %s93, %s94
      %p98 = pneg %p92
      %p99 = scmp.eq.s32.totalorder %s15, 1
      %p100 = por %p98, %p99
      %p101 = scmp.ne.s32.totalorder %s93, %s96
      %p102 = scmp.eq.s32.totalorder %s15, 0
      %p103 = por %p101, %p102
      %p104 = scmp.ne.s32.totalorder %s93, %s96
      %p105 = scmp.eq.s32.totalorder %s20, 1
      %p106 = por %p104, %p105
      %p107 = scmp.ne.s32.totalorder %s96, %s97
      %p108 = scmp.eq.s32.totalorder %s20, 0
      %p109 = por %p107, %p108
      %p110 = scmp.ne.s32.totalorder %s96, %s97
      %p111 = scmp.eq.s32.totalorder %s21, 1
      %p112 = por %p110, %p111
      %p114 = scmp.ne.s32.totalorder %s97, %s113
      %p115 = scmp.eq.s32.totalorder %s21, 0
      %p116 = por %p114, %p115
      %p117 = scmp.le.s32.totalorder 1, %s15
      %p118 = scmp.lt.s32.totalorder %s15, 3
      %p119 = pnand %p117, %p118
      %p120 = pneg %p119
      // Predicated region
      $region9: #{tpu_custom_call.1} parent=5 // pred_check
        _
      $region10: #{tpu_custom_call.1} parent=5 // pred_check_branch
        %122 = sbr.rel (%p119) target = $region12
      $region11: #{tpu_custom_call.1} parent=5 // pred_region
        %s123 = ssub.s32 %s15, 1
        // Predicated region
        $region13: #{tpu_custom_call.1} parent=11 // pred_check
          %p124 = pneg %p62
        $region14: #{tpu_custom_call.1} parent=11 // pred_check_branch
          %126 = sbr.rel (%p124) target = $region16
        $region15: #{tpu_custom_call.1} parent=11 // pred_region
          _
        $region16: #{tpu_custom_call.1} parent=11 // pred_fallthru
          _
        // Predicated region
        $region17: #{tpu_custom_call.1} parent=11 // pred_check
          %p127 = pneg %p83
        $region18: #{tpu_custom_call.1} parent=11 // pred_check_branch
          %129 = sbr.rel (%p127) target = $region20
        $region19: #{tpu_custom_call.1} parent=11 // pred_region
          _
        $region20: #{tpu_custom_call.1} parent=11 // pred_fallthru
          _
      $region12: #{tpu_custom_call.1} parent=5 // pred_fallthru
        _
      %p130 = scmp.lt.s32.totalorder %s15, 2
      // Predicated region
      $region21: #{tpu_custom_call.1} parent=5 // pred_check
        %p131 = pneg %p130
      $region22: #{tpu_custom_call.1} parent=5 // pred_check_branch
        %133 = sbr.rel (%p131) target = $region24
      $region23: #{tpu_custom_call.1} parent=5 // pred_region
        // Predicated region
        $region25: #{tpu_custom_call.1} parent=23 // pred_check
          %p134 = pneg %p35
        $region26: #{tpu_custom_call.1} parent=23 // pred_check_branch
          %136 = sbr.rel (%p134) target = $region28
        $region27: #{tpu_custom_call.1} parent=23 // pred_region
          %s137 = sand.u32 %s25, 1
          %s138 = scalar_lea.sflag [#allocation3], %s137
          %s139 = sand.u32 %s25, 1
          %s140 = smul.addr %s139, 64
          %s141 = scalar_lea.vmem [#allocation2], %s140
          %s143 = ssub.s32 1024, 1024
          %144 = vsyncadd %s138, %s143
          %s145 = smul.addr %s15, 8
          %s146 = smul.addr %s145, 128
          %s147 = scalar_lea.hbm %s0, %s146
          %s148 = sshll.u32 %s141, 4
          %s149 = int_to_ptr.vmem [resolvable:$true] %s148
          %154 = dma.hbm_to_vmem [thread:$0]  %s147, 1024, %s149, %s138, 256, 256, 16
        $region28: #{tpu_custom_call.1} parent=23 // pred_fallthru
          _
      $region24: #{tpu_custom_call.1} parent=5 // pred_fallthru
        _
      %p155 = scmp.le.s32.totalorder 1, %s15
      %p156 = scmp.lt.s32.totalorder %s15, 3
      %p157 = pnand %p155, %p156
      %p158 = pneg %p157
      // Predicated region
      $region29: #{tpu_custom_call.1} parent=5 // pred_check
        _
      $region30: #{tpu_custom_call.1} parent=5 // pred_check_branch
        %160 = sbr.rel (%p157) target = $region32
      $region31: #{tpu_custom_call.1} parent=5 // pred_region
        %s161 = ssub.s32 %s15, 1
        %s162 = sand.u32 %s28, 1
        %s163 = scalar_lea.sflag [#allocation3], %s162
        %s164 = sand.u32 %s28, 1
        %s165 = smul.addr %s164, 64
        %s166 = scalar_lea.vmem [#allocation2], %s165
        // Predicated region
        $region33: #{tpu_custom_call.1} parent=31 // pred_check
          %p167 = pneg %p41
        $region34: #{tpu_custom_call.1} parent=31 // pred_check_branch
          %169 = sbr.rel (%p167) target = $region36
        $region35: #{tpu_custom_call.1} parent=31 // pred_region
          %170 = dma.done %s163, 1024
        $region36: #{tpu_custom_call.1} parent=31 // pred_fallthru
          _
        %s171 = sand.u32 %s28, 1
        %s172 = scalar_lea.sflag [#allocation3], %s171
        %s173 = sand.u32 %s28, 1
        %s174 = smul.addr %s173, 64
        %s175 = scalar_lea.vmem [#allocation2], %s174
        %p176 = pneg %p41
        %p177 = pneg %p38
        %p178 = pneg %p62
        %p179 = pneg %p59
        %p180 = pneg %p83
        %p181 = pneg %p80
        %p182 = pneg %p109
        %p183 = pneg %p106
        %s184 = sand.u32 %s96, 1
        %s185 = scalar_lea.sflag [#allocation4], %s184
        %s186 = sand.u32 %s96, 1
        %s187 = smul.addr %s186, 64
        %s188 = scalar_lea.vmem [#allocation5], %s187
        %v189 = vld [vmem:[%s1] sm:$0xff]
        %v190 = vld [vmem:[%s1 + $0x8] sm:$0xff]
        %v191 = vld [vmem:[%s1 + $0x10] sm:$0xff]
        %v192 = vld [vmem:[%s1 + $0x18] sm:$0xff]
        %v193 = vld [vmem:[%s166] sm:$0xff]
        %v194 = vld [vmem:[%s166 + $0x8] sm:$0xff]
        %v195 = vld [vmem:[%s166 + $0x10] sm:$0xff]
        %v196 = vld [vmem:[%s166 + $0x18] sm:$0xff]
        %v197 = vld [vmem:[%s166 + $0x20] sm:$0xff]
        %v198 = vld [vmem:[%s166 + $0x28] sm:$0xff]
        %v199 = vld [vmem:[%s166 + $0x30] sm:$0xff]
        %v200 = vld [vmem:[%s166 + $0x38] sm:$0xff]
        %v201 = vld [vmem:[%s2] sm:$0xff]
        %v202 = vld [vmem:[%s2 + $0x8] sm:$0xff]
        %v203 = vld [vmem:[%s2 + $0x10] sm:$0xff]
        %v204 = vld [vmem:[%s2 + $0x18] sm:$0xff]
        %206 = vset.pattern.permute.xlu0 0
        %207 = vperm.xlu0 %206, %v201
        %v208 = vpop.permute.xlu0 %207
        %211 = vset.pattern.permute.xlu0 0
        %212 = vperm.xlu0 %211, %v202
        %v213 = vpop.permute.xlu0 %212
        %216 = vset.pattern.permute.xlu0 0
        %217 = vperm.xlu0 %216, %v203
        %v218 = vpop.permute.xlu0 %217
        %221 = vset.pattern.permute.xlu0 0
        %222 = vperm.xlu0 %221, %v204
        %v223 = vpop.permute.xlu0 %222
        %vm225 = vcmask 261120
        %v227 = vsel %vm225, %v189, 0
        %v230 = vsel %vm225, %v190, 0
        %v233 = vsel %vm225, %v191, 0
        %v236 = vsel %vm225, %v192, 0
        %238 = vmatprep.subr.mxu0 %v194
        %239 = vmatpush1.msra.mxu0 %v193
        %240 = vmatprep.subr.mxu0 %v196
        %241 = vmatpush1.msra.mxu0 %v195
        %242 = vmatprep.subr.mxu0 %v198
        %243 = vmatpush1.msra.mxu0 %v197
        %244 = vmatprep.subr.mxu0 %v200
        %245 = vmatpush1.msra.mxu0 %v199
        %246 = vmatprep.subr.mxu0 0.0
        %247 = vmatpush1.msra.mxu0 0.0
        %248 = vmatprep.subr.mxu0 0.0
        %249 = vmatpush1.msra.mxu0 0.0
        %250 = vmatprep.subr.mxu0 0.0
        %251 = vmatpush1.msra.mxu0 0.0
        %252 = vmatprep.subr.mxu0 0.0
        %253 = vmatpush1.msra.mxu0 0.0
        %254 = vmatprep.subr.mxu0 0.0
        %255 = vmatpush1.msra.mxu0 0.0
        %256 = vmatprep.subr.mxu0 0.0
        %257 = vmatpush1.msra.mxu0 0.0
        %258 = vmatprep.subr.mxu0 0.0
        %259 = vmatpush1.msra.mxu0 0.0
        %260 = vmatprep.subr.mxu0 0.0
        %261 = vmatpush1.msra.mxu0 0.0
        %262 = vmatprep.subr.mxu0 0.0
        %263 = vmatpush1.msra.mxu0 0.0
        %264 = vmatprep.subr.mxu0 0.0
        %265 = vmatpush1.msra.mxu0 0.0
        %266 = vmatprep.subr.mxu0 0.0
        %267 = vmatpush1.msra.mxu0 0.0
        %268 = vmatprep.subr.mxu0 0.0
        %269 = vmatpush1.msra.mxu0 0.0
        %270 = vmatprep.subr.mxu0 0.0
        %271 = vmatpush1.msra.mxu0 0.0
        %272 = vmatprep.subr.mxu0 0.0
        %273 = vmatpush1.msra.mxu0 0.0
        %274 = vmatprep.subr.mxu0 0.0
        %275 = vmatpush1.msra.mxu0 0.0
        %276 = vmatprep.subr.mxu0 0.0
        %277 = vmatpush1.msra.mxu0 0.0
        %278 = vmatprep.subr.mxu0 0.0
        %279 = vmatpush1.msra.mxu0 0.0
        %280 = vmatprep.subr.mxu0 0.0
        %281 = vmatpush1.msra.mxu0 0.0
        %282 = vmatprep.subr.mxu0 0.0
        %283 = vmatpush1.msra.mxu0 0.0
        %284 = vmatprep.subr.mxu0 0.0
        %285 = vmatpush1.msra.mxu0 0.0
        %286 = vmatprep.subr.mxu0 0.0
        %287 = vmatpush1.msra.mxu0 0.0
        %288 = vmatprep.subr.mxu0 0.0
        %289 = vmatpush1.msra.mxu0 0.0
        %290 = vmatprep.subr.mxu0 0.0
        %291 = vmatpush1.msra.mxu0 0.0
        %292 = vmatprep.subr.mxu0 0.0
        %293 = vmatpush1.msra.mxu0 0.0
        %294 = vmatprep.subr.mxu0 0.0
        %295 = vmatpush1.msra.mxu0 0.0
        %296 = vmatprep.subr.mxu0 0.0
        %297 = vmatpush1.msra.mxu0 0.0
        %298 = vmatprep.subr.mxu0 0.0
        %299 = vmatpush1.msra.mxu0 0.0
        %300 = vmatprep.subr.mxu0 0.0
        %301 = vmatpush1.msra.mxu0 0.0
        %302 = vmatprep.mubr.f32.mxu0 0.0
        %303 = vmatmul.mubr.f32.gmra.mrb[0].mxu0 %v227
        %v304 = vpop.f32.mrb[0].mxu0
        %v305 = vadd.f32 %v208, %v304
        %v306 = vpop.f32.mrb[0].mxu0
        %v307 = vadd.f32 %v208, %v306
        %308 = vmatprep.mubr.f32.mxu0 0.0
        %309 = vmatmul.mubr.f32.gmra.mrb[0].mxu0 %v230
        %v310 = vpop.f32.mrb[0].mxu0
        %v311 = vadd.f32 %v213, %v310
        %v312 = vpop.f32.mrb[0].mxu0
        %v313 = vadd.f32 %v213, %v312
        %314 = vmatprep.mubr.f32.mxu0 0.0
        %315 = vmatmul.mubr.f32.gmra.mrb[0].mxu0 %v233
        %v316 = vpop.f32.mrb[0].mxu0
        %v317 = vadd.f32 %v218, %v316
        %v318 = vpop.f32.mrb[0].mxu0
        %v319 = vadd.f32 %v218, %v318
        %320 = vmatprep.mubr.f32.mxu0 0.0
        %321 = vmatmul.mubr.f32.gmra.mrb[0].mxu0 %v236
        %v322 = vpop.f32.mrb[0].mxu0
        %v323 = vadd.f32 %v223, %v322
        %v324 = vpop.f32.mrb[0].mxu0
        %v325 = vadd.f32 %v223, %v324
        %326 = vdwg.mxu0
        %327 = vst [vmem:[%s188] sm:$0xff] %v305
        %328 = vst [vmem:[%s188 + $0x8] sm:$0xff] %v307
        %329 = vst [vmem:[%s188 + $0x10] sm:$0xff] %v311
        %330 = vst [vmem:[%s188 + $0x18] sm:$0xff] %v313
        %331 = vst [vmem:[%s188 + $0x20] sm:$0xff] %v317
        %332 = vst [vmem:[%s188 + $0x28] sm:$0xff] %v319
        %333 = vst [vmem:[%s188 + $0x30] sm:$0xff] %v323
        %334 = vst [vmem:[%s188 + $0x38] sm:$0xff] %v325
        %s335 = sand.u32 %s96, 1
        %s336 = scalar_lea.sflag [#allocation4], %s335
        %s337 = sand.u32 %s96, 1
        %s338 = smul.addr %s337, 64
        %s339 = scalar_lea.vmem [#allocation5], %s338
        // Predicated region
        $region37: #{tpu_custom_call.1} parent=31 // pred_check
          %p340 = pneg %p106
        $region38: #{tpu_custom_call.1} parent=31 // pred_check_branch
          %342 = sbr.rel (%p340) target = $region40
        $region39: #{tpu_custom_call.1} parent=31 // pred_region
          %s344 = ssub.s32 1024, 1024
          %345 = vsyncadd %s336, %s344
          %s346 = smul.addr %s20, 8
          %s347 = smul.addr %s346, 128
          %s348 = scalar_lea.hbm %s3, %s347
          %s349 = sshll.u32 %s339, 4
          %s350 = int_to_ptr.vmem [resolvable:$true] %s349
          %355 = dma.vmem_to_hbm [thread:$0]  %s350, 1024, %s348, %s336, 256, 256, 16
        $region40: #{tpu_custom_call.1} parent=31 // pred_fallthru
          _
      $region32: #{tpu_custom_call.1} parent=5 // pred_fallthru
        _
      %p356 = scmp.le.s32.totalorder 2, %s15
      // Predicated region
      $region41: #{tpu_custom_call.1} parent=5 // pred_check
        %p357 = pneg %p356
      $region42: #{tpu_custom_call.1} parent=5 // pred_check_branch
        %359 = sbr.rel (%p357) target = $region44
      $region43: #{tpu_custom_call.1} parent=5 // pred_region
        %s360 = ssub.s32 %s15, 2
        // Predicated region
        $region45: #{tpu_custom_call.1} parent=43 // pred_check
          %p361 = pneg %p112
        $region46: #{tpu_custom_call.1} parent=43 // pred_check_branch
          %363 = sbr.rel (%p361) target = $region48
        $region47: #{tpu_custom_call.1} parent=43 // pred_region
          %s364 = sand.u32 %s97, 1
          %s365 = scalar_lea.sflag [#allocation4], %s364
          %s366 = sand.u32 %s97, 1
          %s367 = smul.addr %s366, 64
          %s368 = scalar_lea.vmem [#allocation5], %s367
          %369 = dma.done %s365, 1024
        $region48: #{tpu_custom_call.1} parent=43 // pred_fallthru
          _
      $region44: #{tpu_custom_call.1} parent=5 // pred_fallthru
        _
    $region6: #{tpu_custom_call.1} parent=1 // loop_footer
      %s19 = sadd.s32 1, %s15
    $region7: #{tpu_custom_call.1} parent=1 // loop_footer_branch
      %14 = sbr.rel target = $region3
    $region8: #{tpu_custom_call.1} parent=1 // loop_exit
      _
    %370 = vsyncpa [#allocation3], 1
    %s371 = scalar_lea.sflag [#allocation3], 1
    %372 = vsyncpa %s371, 1
    %373 = vsyncpa [#allocation4], 1
    %s374 = scalar_lea.sflag [#allocation4], 1
    %375 = vsyncpa %s374, 1

</llo_original>
